<compile_context>
chip_gen: v7x
topology: tpu7x:2x2x1
jax: 0.10.0
libtpu: 0.0.40
codegen_flags: <defaults>
</compile_context>

<pallas_src>
import functools
import math

import jax
import jax.numpy as jnp
from jax.experimental import pallas as pl
from jax.experimental.pallas import tpu as pltpu


def _pick_tile(s, target=256):
    """Largest multiple-of-8 divisor of s that is <= target, else s (full dim)."""
    if s <= target:
        return s
    best = None
    for t in range(8, target + 1, 8):
        if s % t == 0:
            best = t
    return best if best is not None else s


# --------------------------------------------------------------------------- #
# Kernel 1: fused QKV projection                                               #
# --------------------------------------------------------------------------- #
def _qkv_proj_kernel(x_ref, w_ref, b_ref, qkv_ref):
    # x_ref: (TS, E); w_ref: (E, 3E) = in_proj_weight^T (q columns pre-scaled);
    # b_ref: (1, 3E); qkv_ref: (TS, 3E).  Operands stay in native dtype; f32 acc.
    acc = jnp.dot(x_ref[...], w_ref[...], preferred_element_type=jnp.float32)
    qkv_ref[...] = (acc + b_ref[...].astype(jnp.float32)).astype(qkv_ref.dtype)


# --------------------------------------------------------------------------- #
# Kernel 2: flash attention + out-proj + residual + LayerNorm                  #
# --------------------------------------------------------------------------- #
def _flash_attn_ln_kernel(q_ref, k_ref, v_ref, x_ref, w_out_ref, b_out_ref,
                          gamma_ref, beta_ref, o_ref, m_s, l_s, acc_s,
                          *, num_heads):
    kj = pl.program_id(2)

    @pl.when(kj == 0)
    def _init():
        m_s[...] = jnp.full(m_s.shape, -jnp.inf, dtype=m_s.dtype)
        l_s[...] = jnp.zeros(l_s.shape, dtype=l_s.dtype)
        acc_s[...] = jnp.zeros(acc_s.shape, dtype=acc_s.dtype)

    # Heads batched on the leading dim: (H,TQ,d) x (H,TK,d) -> (H,TQ,TK).
    s = jnp.einsum("hqd,hkd->hqk", q_ref[...], k_ref[...],
                   preferred_element_type=jnp.float32)
    m_prev = m_s[...]
    m_new = jnp.maximum(m_prev, s.max(axis=-1, keepdims=True))
    alpha = jnp.exp(m_prev - m_new)
    p = jnp.exp(s - m_new)
    l_s[...] = alpha * l_s[...] + p.sum(axis=-1, keepdims=True)
    acc_s[...] = alpha * acc_s[...] + jnp.einsum(
        "hqk,hkd->hqd", p.astype(v_ref.dtype), v_ref[...],
        preferred_element_type=jnp.float32)
    m_s[...] = m_new

    @pl.when(kj == pl.num_programs(2) - 1)
    def _finalize():
        tq = q_ref.shape[1]
        e = w_out_ref.shape[-1]
        # Softmax normalization: one EUP reciprocal per row, then a single vmul.
        attn = acc_s[...] * pl.reciprocal(l_s[...], approx=True)      # (H, TQ, d)
        attn = attn.astype(w_out_ref.dtype)
        # Output projection accumulated per head (no concat / relayout):
        #   out = sum_h attn_h @ Wout_h, with Wout_h = (W_out^T)[h*d:(h+1)*d, :].
        y = jnp.zeros((tq, e), jnp.float32)
        for h in range(num_heads):                                    # static unroll
            y = y + jnp.dot(attn[h], w_out_ref[h],
                            preferred_element_type=jnp.float32)
        y = y + b_out_ref[...].astype(jnp.float32)
        # Residual + LayerNorm (eps = 1e-5), statistics in f32.
        y = y + x_ref[...].astype(jnp.float32)
        mean = jnp.mean(y, axis=-1, keepdims=True)
        var = jnp.mean((y - mean) ** 2, axis=-1, keepdims=True)
        y_hat = (y - mean) * jax.lax.rsqrt(var + 1e-5)
        out = (y_hat * gamma_ref[...].astype(jnp.float32)
               + beta_ref[...].astype(jnp.float32))
        # TODO(synk): for toy E < 128 this store is lane-masked; production E>=128
        # (or folding S into the lane dim) makes it lane-dense.
        o_ref[...] = out.astype(o_ref.dtype)


# --------------------------------------------------------------------------- #
# Wrapper                                                                      #
# --------------------------------------------------------------------------- #
def attention_block(x, w_in, b_in, w_out, b_out, gamma, beta, *, num_heads,
                    q_tile=None, kv_tile=None):
    """Eval-mode AttentionBlock forward.  x: (B, S, E) -> (B, S, E)."""
    B, S, E = x.shape
    assert E % num_heads == 0
    H = num_heads
    d = E // H
    scale = 1.0 / math.sqrt(d)

    tq = q_tile or _pick_tile(S)
    tk = kv_tile or _pick_tile(S)
    assert S % tq == 0 and S % tk == 0

    # ---- one-time weight layout prep (wrapper-side, off the critical loop) ----
    # in_proj_weight (3E, E) = [Wq; Wk; Wv] row-stacked -> transposed (E, 3E);
    # the 1/sqrt(d) query scale is folded into Wq / bq.
    w_in_t = jnp.transpose(w_in)                                        # (E, 3E)
    w_in_t = jnp.concatenate([w_in_t[:, :E] * scale, w_in_t[:, E:]], axis=1)
    b_in_s = jnp.concatenate([b_in[:E] * scale, b_in[E:]]).reshape(1, 3 * E)
    # out_proj: attn @ W_out^T == sum_h attn_h @ (W_out^T)[h*d:(h+1)*d, :]
    w_out_h = jnp.transpose(w_out).reshape(H, d, E)                     # (H, d, E)
    b_out2 = b_out.reshape(1, E)
    gamma2 = gamma.reshape(1, E)
    beta2 = beta.reshape(1, E)

    itemsize = x.dtype.itemsize

    # ---- kernel 1: fused QKV projection --------------------------------------
    ts = tq
    qkv = pl.pallas_call(
        _qkv_proj_kernel,
        out_shape=jax.ShapeDtypeStruct((B, S, 3 * E), x.dtype),
        grid_spec=pltpu.PrefetchScalarGridSpec(
            num_scalar_prefetch=0,
            grid=(B, S // ts),
            in_specs=[
                pl.BlockSpec((None, ts, E), lambda b, i: (b, i, 0)),    # x
                pl.BlockSpec((E, 3 * E), lambda b, i: (0, 0)),          # W_in^T
                pl.BlockSpec((1, 3 * E), lambda b, i: (0, 0)),          # b_in
            ],
            out_specs=pl.BlockSpec((None, ts, 3 * E), lambda b, i: (b, i, 0)),
        ),
        compiler_params=pltpu.CompilerParams(
            dimension_semantics=("parallel", "parallel")),
        cost_estimate=pl.CostEstimate(
            flops=2 * B * S * E * 3 * E,
            transcendentals=0,
            bytes_accessed=(B * S * E + E * 3 * E + B * S * 3 * E) * itemsize),
    )(x, w_in_t, b_in_s)

    # Split heads once in XLA (pure layout plumbing): (B,S,3,H,d) -> (B,H,S,d).
    qkv = qkv.reshape(B, S, 3, H, d)
    q = jnp.transpose(qkv[:, :, 0], (0, 2, 1, 3))
    k = jnp.transpose(qkv[:, :, 1], (0, 2, 1, 3))
    v = jnp.transpose(qkv[:, :, 2], (0, 2, 1, 3))

    # ---- kernel 2: flash attention + out-proj + residual + LayerNorm ---------
    kernel = functools.partial(_flash_attn_ln_kernel, num_heads=H)
    out = pl.pallas_call(
        kernel,
        out_shape=jax.ShapeDtypeStruct((B, S, E), x.dtype),
        grid_spec=pltpu.PrefetchScalarGridSpec(
            num_scalar_prefetch=0,
            grid=(B, S // tq, S // tk),
            in_specs=[
                pl.BlockSpec((None, H, tq, d), lambda b, i, j: (b, 0, i, 0)),  # q
                pl.BlockSpec((None, H, tk, d), lambda b, i, j: (b, 0, j, 0)),  # k
                pl.BlockSpec((None, H, tk, d), lambda b, i, j: (b, 0, j, 0)),  # v
                pl.BlockSpec((None, tq, E), lambda b, i, j: (b, i, 0)),        # x (residual)
                pl.BlockSpec((H, d, E), lambda b, i, j: (0, 0, 0)),            # W_out per head
                pl.BlockSpec((1, E), lambda b, i, j: (0, 0)),                  # b_out
                pl.BlockSpec((1, E), lambda b, i, j: (0, 0)),                  # gamma
                pl.BlockSpec((1, E), lambda b, i, j: (0, 0)),                  # beta
            ],
            out_specs=pl.BlockSpec((None, tq, E), lambda b, i, j: (b, i, 0)),
            scratch_shapes=[
                pltpu.VMEM((H, tq, 1), jnp.float32),   # running max
                pltpu.VMEM((H, tq, 1), jnp.float32),   # running denominator
                pltpu.VMEM((H, tq, d), jnp.float32),   # output accumulator
            ],
        ),
        compiler_params=pltpu.CompilerParams(
            dimension_semantics=("parallel", "parallel", "arbitrary")),
        cost_estimate=pl.CostEstimate(
            flops=4 * B * S * S * E + 2 * B * S * E * E,
            transcendentals=B * H * S * S,
            bytes_accessed=(5 * B * S * E + E * E) * itemsize),
    )(q, k, v, x, w_out_h, b_out2, gamma2, beta2)
    return out


# --------------------------------------------------------------------------- #
# Pure-JAX reference (PyTorch MultiheadAttention + residual + LayerNorm)       #
# --------------------------------------------------------------------------- #
def _reference(x, w_in, b_in, w_out, b_out, gamma, beta, num_heads):
    B, S, E = x.shape
    d = E // num_heads
    qkv = jnp.einsum("bse,fe->bsf", x, w_in) + b_in
    q, k, v = qkv[..., :E], qkv[..., E:2 * E], qkv[..., 2 * E:]
    q = q.reshape(B, S, num_heads, d).transpose(0, 2, 1, 3)
    k = k.reshape(B, S, num_heads, d).transpose(0, 2, 1, 3)
    v = v.reshape(B, S, num_heads, d).transpose(0, 2, 1, 3)
    s = jnp.einsum("bhqd,bhkd->bhqk", q, k) / math.sqrt(d)
    p = jax.nn.softmax(s, axis=-1)
    o = jnp.einsum("bhqk,bhkd->bhqd", p, v).transpose(0, 2, 1, 3).reshape(B, S, E)
    o = jnp.einsum("bse,fe->bsf", o, w_out) + b_out
    y = x + o
    mean = jnp.mean(y, axis=-1, keepdims=True)
    var = jnp.var(y, axis=-1, keepdims=True)
    return (y - mean) / jnp.sqrt(var + 1e-5) * gamma + beta


if __name__ == "__main__":
    B, S, E, H = 2, 64, 32, 4   # batch, seq, embed_dim, num_heads

    key = jax.random.PRNGKey(0)
    kx, k1, k2, k3, k4, k5, k6 = jax.random.split(key, 7)

    x = jax.random.normal(kx, (B, S, E), dtype=jnp.float32)
    # nn.MultiheadAttention parameter shapes (PyTorch layout).
    w_in = jax.random.normal(k1, (3 * E, E), dtype=jnp.float32) * (1.0 / math.sqrt(E))
    b_in = jax.random.normal(k2, (3 * E,), dtype=jnp.float32) * 0.02
    w_out = jax.random.normal(k3, (E, E), dtype=jnp.float32) * (1.0 / math.sqrt(E))
    b_out = jax.random.normal(k4, (E,), dtype=jnp.float32) * 0.02
    # nn.LayerNorm affine params.
    gamma = 1.0 + 0.1 * jax.random.normal(k5, (E,), dtype=jnp.float32)
    beta = 0.1 * jax.random.normal(k6, (E,), dtype=jnp.float32)

    # Tiles chosen to exercise both the query tiling and the online-softmax
    # accumulation over multiple KV tiles (grid = (2, 2, 2)).
    out = attention_block(x, w_in, b_in, w_out, b_out, gamma, beta,
                          num_heads=H, q_tile=32, kv_tile=32)
    out = jax.block_until_ready(out)

    ref = _reference(x, w_in, b_in, w_out, b_out, gamma, beta, H)
    assert jnp.allclose(out, ref, atol=5e-3, rtol=5e-3), "mismatch vs. reference"

    print("KERNEL_OK")
</pallas_src>

<mosaic_0001>
module attributes {stable_mosaic.version = 11 : i64} {
  func.func @_qkv_proj_kernel(%arg0: i32, %arg1: i32, %arg2: memref<1x32x32xf32, #tpu.memory_space<vmem>>, %arg3: memref<32x96xf32, #tpu.memory_space<vmem>>, %arg4: memref<1x96xf32, #tpu.memory_space<vmem>>, %arg5: memref<1x32x96xf32, #tpu.memory_space<vmem>>) attributes {dimension_semantics = [#tpu.dimension_semantics<parallel>, #tpu.dimension_semantics<parallel>], iteration_bounds = array<i64: 2, 2>, scalar_prefetch = 0 : i64, scratch_operands = 0 : i64, tpu.core_type = #tpu.core_type<tc>, window_params = [{transform_indices = @transform_0, window_bounds = array<i64: 1, 32, 32>}, {pipeline_mode = #tpu.pipeline_mode<synchronous>, transform_indices = @transform_1, window_bounds = array<i64: 32, 96>}, {pipeline_mode = #tpu.pipeline_mode<synchronous>, transform_indices = @transform_2, window_bounds = array<i64: 1, 96>}, {transform_indices = @transform_3, window_bounds = array<i64: 1, 32, 96>}]} {
    %c0 = arith.constant 0 : index
    %c0_0 = arith.constant 0 : index
    %c0_1 = arith.constant 0 : index
    %0 = vector.load %arg2[%c0, %c0_0, %c0_1] : memref<1x32x32xf32, #tpu.memory_space<vmem>>, vector<1x32x32xf32>
    %1 = vector.shape_cast %0 : vector<1x32x32xf32> to vector<32x32xf32>
    %c0_2 = arith.constant 0 : index
    %c0_3 = arith.constant 0 : index
    %2 = vector.load %arg3[%c0_2, %c0_3] : memref<32x96xf32, #tpu.memory_space<vmem>>, vector<32x96xf32>
    %cst = arith.constant dense<0.000000e+00> : vector<32x96xf32>
    %3 = tpu.matmul %1, %2, %cst {dimension_numbers = #tpu.dot_dimension_numbers<[1], [0], [0], [1], [0, 0, 1, 1], [], []>} : vector<32x32xf32>, vector<32x96xf32>, vector<32x96xf32> -> vector<32x96xf32>
    %c0_4 = arith.constant 0 : index
    %c0_5 = arith.constant 0 : index
    %4 = vector.load %arg4[%c0_4, %c0_5] : memref<1x96xf32, #tpu.memory_space<vmem>>, vector<1x96xf32>
    %5 = vector.broadcast %4 : vector<1x96xf32> to vector<32x96xf32>
    %6 = arith.addf %3, %5 : vector<32x96xf32>
    %c0_6 = arith.constant 0 : index
    %c0_7 = arith.constant 0 : index
    %c0_8 = arith.constant 0 : index
    %7 = vector.load %arg5[%c0_6, %c0_7, %c0_8] : memref<1x32x96xf32, #tpu.memory_space<vmem>>, vector<1x32x96xf32>
    %8 = vector.shape_cast %7 : vector<1x32x96xf32> to vector<32x96xf32>
    %9 = vector.shape_cast %6 : vector<32x96xf32> to vector<1x32x96xf32>
    tpu.vector_store %arg5[%c0_6, %c0_7, %c0_8], %9 {strides = array<i32>} : memref<1x32x96xf32, #tpu.memory_space<vmem>>, vector<1x32x96xf32>,
    return
  }
  func.func @transform_0(%arg0: i32, %arg1: i32) -> (i32, i32, i32) {
    %c0_i32 = arith.constant 0 : i32
    %c0_i32_0 = arith.constant 0 : i32
    return %arg0, %arg1, %c0_i32 : i32, i32, i32
  }
  func.func @transform_1(%arg0: i32, %arg1: i32) -> (i32, i32) {
    %c0_i32 = arith.constant 0 : i32
    %c0_i32_0 = arith.constant 0 : i32
    %c0_i32_1 = arith.constant 0 : i32
    return %c0_i32, %c0_i32_0 : i32, i32
  }
  func.func @transform_2(%arg0: i32, %arg1: i32) -> (i32, i32) {
    %c0_i32 = arith.constant 0 : i32
    %c0_i32_0 = arith.constant 0 : i32
    %c0_i32_1 = arith.constant 0 : i32
    return %c0_i32, %c0_i32_0 : i32, i32
  }
  func.func @transform_3(%arg0: i32, %arg1: i32) -> (i32, i32, i32) {
    %c0_i32 = arith.constant 0 : i32
    %c0_i32_0 = arith.constant 0 : i32
    return %arg0, %arg1, %c0_i32 : i32, i32, i32
  }
}

</mosaic_0001>

<llo_original>
// kernel: tpu_custom_call.1
$region0: #{tpu_custom_call.1}
  #allocation0 [shape = 'u32[]', space=smem, size = 0x4, offset = 0x4, fixed_abs, tag = 'smem constant byte address 0x4 - core index']
  #allocation1 [shape = 'u32[144,128]{1,0:T(1,128)}', space=vmem, size = 0x12000, scoped, tag = 'internal scratch']
  %s0 = inlined_call_operand.vmem [shape: f32[2,64,32], index: 0, kind: input, shape index: {}]
  %s1 = inlined_call_operand.vmem [shape: f32[32,96], index: 1, kind: input, shape index: {}]
  %s2 = inlined_call_operand.vmem [shape: f32[1,96], index: 2, kind: input, shape index: {}]
  %s3 = inlined_call_operand.hbm [shape: f32[2,64,96], index: 3, kind: output, shape index: {}]
  %s4 = sld [smem:[#allocation0]]
  $region45: #{tpu_custom_call.1} parent=0
    _
  %s6 = ssub.s32 1, %s4
  %s7 = scalar_select 0, %s6, %s4
  $region1: #{tpu_custom_call.1} parent=0
    #allocation2 [shape = 'u8[32768]{0}', space=vmem, size = 0x8000, scoped, tag = 'output window, operand 0']
    #allocation3 [shape = 's32[2]{0}', space=sflag, size = 0x8, scoped, tag = 'scoped memory for tpu_custom_call.1']
    %8 = vsyncpa [#allocation3], 0
    %s9 = scalar_lea.sflag [#allocation3], 1
    %10 = vsyncpa %s9, 0
    loop: start=0, step=1, limit=6
    $region2: #{tpu_custom_call.1} parent=1 // loop_pre_header
      _
    $region3: #{tpu_custom_call.1} parent=1 // loop_header
      %s12 = sphi 0, %s16
      %p13 = scmp.ge.s32.totalorder %s12, 6
      %s19 = sphi 0, %s31
      %s20 = sphi 0, %s27
      %s21 = sphi 0, %s19
      %s22 = sphi 0, %s20
      %s23 = sphi 0, %s21
      %s24 = sphi 0, %s22
      %s36 = sphi 0, %s38
      %s39 = sphi 0, %s36
      %s40 = sphi 0, %s39
      %s56 = sphi 0, %s40
      %s60 = sphi 0, %s60
      %s62 = sphi 0, %s60
      %s63 = sphi 0, %s62
      %s77 = sphi 0, %s63
      %s81 = sphi 0, %s81
      %s83 = sphi 0, %s81
      %s84 = sphi 0, %s83
      %s98 = sphi 0, %s84
      %s106 = sphi 0, %s108
      %s109 = sphi 0, %s106
      %s110 = sphi 0, %s109
      %s126 = sphi 0, %s110
    $region4: #{tpu_custom_call.1} parent=1 // loop_header_branch
      %15 = sbr.rel (%p13) target = $region8
    $region5: #{tpu_custom_call.1} parent=1 // loop_body
      %s17 = ssub.s32 %s12, 1
      %s18 = ssub.s32 %s12, 2
      %s25 = sadd.s32 1, %s20
      %p26 = scmp.ge.s32.totalorder %s25, 2
      %s27 = scalar_select %p26, 0, %s25
      %s28 = sadd.s32 1, %s19
      %s29 = scalar_select %p26, %s28, %s19
      %p30 = scmp.ge.s32.totalorder %s29, 2
      %s31 = scalar_select %p30, 0, %s29
      %s32 = ssub.s32 %s19, %s31
      %s33 = ssub.s32 %s20, %s27
      %s34 = sor.u32 %s32, %s33
      %p35 = scmp.eq.s32.totalorder %s34, 0
      %s37 = sadd.s32 %s36, 1
      %s38 = scalar_select %p35, %s36, %s37
      %p41 = pneg %p35
      %p42 = scmp.eq.s32.totalorder %s12, 3
      %p43 = por %p41, %p42
      %p44 = scmp.ne.s32.totalorder %s36, %s39
      %p45 = scmp.eq.s32.totalorder %s12, 0
      %p46 = por %p44, %p45
      %p47 = scmp.ne.s32.totalorder %s36, %s39
      %p48 = scmp.eq.s32.totalorder %s17, 3
      %p49 = por %p47, %p48
      %p50 = scmp.ne.s32.totalorder %s39, %s40
      %p51 = scmp.eq.s32.totalorder %s17, 0
      %p52 = por %p50, %p51
      %p53 = scmp.ne.s32.totalorder %s39, %s40
      %p54 = scmp.eq.s32.totalorder %s18, 3
      %p55 = por %p53, %p54
      %p57 = scmp.ne.s32.totalorder %s40, %s56
      %p58 = scmp.eq.s32.totalorder %s18, 0
      %p59 = por %p57, %p58
      %s61 = sadd.s32 %s60, 1
      %p64 = scmp.eq.s32.totalorder %s12, 3
      %p65 = scmp.ne.s32.totalorder %s60, %s62
      %p66 = scmp.eq.s32.totalorder %s12, 0
      %p67 = por %p65, %p66
      %p68 = scmp.ne.s32.totalorder %s60, %s62
      %p69 = scmp.eq.s32.totalorder %s17, 3
      %p70 = por %p68, %p69
      %p71 = scmp.ne.s32.totalorder %s62, %s63
      %p72 = scmp.eq.s32.totalorder %s17, 0
      %p73 = por %p71, %p72
      %p74 = scmp.ne.s32.totalorder %s62, %s63
      %p75 = scmp.eq.s32.totalorder %s18, 3
      %p76 = por %p74, %p75
      %p78 = scmp.ne.s32.totalorder %s63, %s77
      %p79 = scmp.eq.s32.totalorder %s18, 0
      %p80 = por %p78, %p79
      %s82 = sadd.s32 %s81, 1
      %p85 = scmp.eq.s32.totalorder %s12, 3
      %p86 = scmp.ne.s32.totalorder %s81, %s83
      %p87 = scmp.eq.s32.totalorder %s12, 0
      %p88 = por %p86, %p87
      %p89 = scmp.ne.s32.totalorder %s81, %s83
      %p90 = scmp.eq.s32.totalorder %s17, 3
      %p91 = por %p89, %p90
      %p92 = scmp.ne.s32.totalorder %s83, %s84
      %p93 = scmp.eq.s32.totalorder %s17, 0
      %p94 = por %p92, %p93
      %p95 = scmp.ne.s32.totalorder %s83, %s84
      %p96 = scmp.eq.s32.totalorder %s18, 3
      %p97 = por %p95, %p96
      %p99 = scmp.ne.s32.totalorder %s84, %s98
      %p100 = scmp.eq.s32.totalorder %s18, 0
      %p101 = por %p99, %p100
      %s102 = ssub.s32 %s19, %s31
      %s103 = ssub.s32 %s20, %s27
      %s104 = sor.u32 %s102, %s103
      %p105 = scmp.eq.s32.totalorder %s104, 0
      %s107 = sadd.s32 %s106, 1
      %s108 = scalar_select %p105, %s106, %s107
      %p111 = pneg %p105
      %p112 = scmp.eq.s32.totalorder %s12, 3
      %p113 = por %p111, %p112
      %p114 = scmp.ne.s32.totalorder %s106, %s109
      %p115 = scmp.eq.s32.totalorder %s12, 0
      %p116 = por %p114, %p115
      %p117 = scmp.ne.s32.totalorder %s106, %s109
      %p118 = scmp.eq.s32.totalorder %s17, 3
      %p119 = por %p117, %p118
      %p120 = scmp.ne.s32.totalorder %s109, %s110
      %p121 = scmp.eq.s32.totalorder %s17, 0
      %p122 = por %p120, %p121
      %p123 = scmp.ne.s32.totalorder %s109, %s110
      %p124 = scmp.eq.s32.totalorder %s18, 3
      %p125 = por %p123, %p124
      %p127 = scmp.ne.s32.totalorder %s110, %s126
      %p128 = scmp.eq.s32.totalorder %s18, 0
      %p129 = por %p127, %p128
      %p130 = scmp.le.s32.totalorder 1, %s12
      %p131 = scmp.lt.s32.totalorder %s12, 5
      %p132 = pnand %p130, %p131
      %p133 = pneg %p132
      // Predicated region
      $region9: #{tpu_custom_call.1} parent=5 // pred_check
        _
      $region10: #{tpu_custom_call.1} parent=5 // pred_check_branch
        %135 = sbr.rel (%p132) target = $region12
      $region11: #{tpu_custom_call.1} parent=5 // pred_region
        %s136 = ssub.s32 %s12, 1
        // Predicated region
        $region13: #{tpu_custom_call.1} parent=11 // pred_check
          %p137 = pneg %p73
        $region14: #{tpu_custom_call.1} parent=11 // pred_check_branch
          %139 = sbr.rel (%p137) target = $region16
        $region15: #{tpu_custom_call.1} parent=11 // pred_region
          _
        $region16: #{tpu_custom_call.1} parent=11 // pred_fallthru
          _
        // Predicated region
        $region17: #{tpu_custom_call.1} parent=11 // pred_check
          %p140 = pneg %p94
        $region18: #{tpu_custom_call.1} parent=11 // pred_check_branch
          %142 = sbr.rel (%p140) target = $region20
        $region19: #{tpu_custom_call.1} parent=11 // pred_region
          _
        $region20: #{tpu_custom_call.1} parent=11 // pred_fallthru
          _
      $region12: #{tpu_custom_call.1} parent=5 // pred_fallthru
        _
      %p143 = scmp.lt.s32.totalorder %s12, 4
      // Predicated region
      $region21: #{tpu_custom_call.1} parent=5 // pred_check
        %p144 = pneg %p143
      $region22: #{tpu_custom_call.1} parent=5 // pred_check_branch
        %146 = sbr.rel (%p144) target = $region24
      $region23: #{tpu_custom_call.1} parent=5 // pred_region
        // Predicated region
        $region25: #{tpu_custom_call.1} parent=23 // pred_check
          %p147 = pneg %p46
        $region26: #{tpu_custom_call.1} parent=23 // pred_check_branch
          %149 = sbr.rel (%p147) target = $region28
        $region27: #{tpu_custom_call.1} parent=23 // pred_region
          %s150 = smul.u32 4, %s20
          %p151 = scmp.lt.s32.totalorder %s19, 1
          %s152 = scalar_select %p151, %s19, 1
          %p153 = scmp.lt.s32.totalorder %s150, 7
          %s154 = scalar_select %p153, %s150, 7
          %s155 = smul.addr %s152, 8
          %s156 = sadd.s32 %s154, %s155
          %s157 = smul.addr %s156, 8
          %s158 = scalar_lea.vmem %s0, %s157
          %s159 = smul.u32 4, %s20
        $region28: #{tpu_custom_call.1} parent=23 // pred_fallthru
          _
      $region24: #{tpu_custom_call.1} parent=5 // pred_fallthru
        _
      %p160 = scmp.le.s32.totalorder 1, %s12
      %p161 = scmp.lt.s32.totalorder %s12, 5
      %p162 = pnand %p160, %p161
      %p163 = pneg %p162
      // Predicated region
      $region29: #{tpu_custom_call.1} parent=5 // pred_check
        _
      $region30: #{tpu_custom_call.1} parent=5 // pred_check_branch
        %165 = sbr.rel (%p162) target = $region32
      $region31: #{tpu_custom_call.1} parent=5 // pred_region
        %s166 = ssub.s32 %s12, 1
        %s167 = smul.u32 4, %s22
        %p168 = scmp.lt.s32.totalorder %s21, 1
        %s169 = scalar_select %p168, %s21, 1
        %p170 = scmp.lt.s32.totalorder %s167, 7
        %s171 = scalar_select %p170, %s167, 7
        %s172 = smul.addr %s169, 8
        %s173 = sadd.s32 %s171, %s172
        %s174 = smul.addr %s173, 8
        %s175 = scalar_lea.vmem %s0, %s174
        %p176 = pneg %p52
        %p177 = pneg %p49
        %p178 = pneg %p73
        %p179 = pneg %p70
        %p180 = pneg %p94
        %p181 = pneg %p91
        %p182 = pneg %p122
        %p183 = pneg %p119
        %s184 = sand.u32 %s109, 1
        %s185 = scalar_lea.sflag [#allocation3], %s184
        %s186 = sand.u32 %s109, 1
        %s187 = smul.addr %s186, 32
        %s188 = scalar_lea.vmem [#allocation2], %s187
        %s189 = smul.u32 4, %s22
        %p190 = scmp.lt.s32.totalorder %s21, 1
        %s191 = scalar_select %p190, %s21, 1
        %p192 = scmp.lt.s32.totalorder %s189, 7
        %s193 = scalar_select %p192, %s189, 7
        %s194 = smul.addr %s191, 8
        %s195 = sadd.s32 %s193, %s194
        %s196 = smul.addr %s195, 8
        %s197 = scalar_lea.vmem %s0, %s196
        %s198 = smul.u32 4, %s22
        %s199 = smul.u32 4, %s22
        %v200 = vld [vmem:[%s197] sm:$0xff]
        %v201 = vld [vmem:[%s197 + $0x8] sm:$0xff]
        %v202 = vld [vmem:[%s197 + $0x10] sm:$0xff]
        %v203 = vld [vmem:[%s197 + $0x18] sm:$0xff]
        %v204 = vld [vmem:[%s1] sm:$0xff]
        %v205 = vld [vmem:[%s1 + $0x8] sm:$0xff]
        %v206 = vld [vmem:[%s1 + $0x10] sm:$0xff]
        %v207 = vld [vmem:[%s1 + $0x18] sm:$0xff]
        %v208 = vld [vmem:[%s2] sm:$0x1]
        %v210 = vlaneseq
        %v211 = vshrl.u32 %v210, 7
        %v212 = vsub.s32 0, %v211
        %v213 = vrot.slane %v208, %v212
        %vm215 = vcmask 261120
        %v217 = vsel %vm215, %v200, 0
        %v220 = vsel %vm215, %v201, 0
        %v223 = vsel %vm215, %v202, 0
        %v226 = vsel %vm215, %v203, 0
        %228 = vmatprep.subr.mxu0 0.0
        %229 = vmatpush1.msra.mxu0 %v204
        %230 = vmatprep.subr.mxu0 0.0
        %231 = vmatpush1.msra.mxu0 %v205
        %232 = vmatprep.subr.mxu0 0.0
        %233 = vmatpush1.msra.mxu0 %v206
        %234 = vmatprep.subr.mxu0 0.0
        %235 = vmatpush1.msra.mxu0 %v207
        %236 = vmatprep.subr.mxu0 0.0
        %237 = vmatpush1.msra.mxu0 0.0
        %238 = vmatprep.subr.mxu0 0.0
        %239 = vmatpush1.msra.mxu0 0.0
        %240 = vmatprep.subr.mxu0 0.0
        %241 = vmatpush1.msra.mxu0 0.0
        %242 = vmatprep.subr.mxu0 0.0
        %243 = vmatpush1.msra.mxu0 0.0
        %244 = vmatprep.subr.mxu0 0.0
        %245 = vmatpush1.msra.mxu0 0.0
        %246 = vmatprep.subr.mxu0 0.0
        %247 = vmatpush1.msra.mxu0 0.0
        %248 = vmatprep.subr.mxu0 0.0
        %249 = vmatpush1.msra.mxu0 0.0
        %250 = vmatprep.subr.mxu0 0.0
        %251 = vmatpush1.msra.mxu0 0.0
        %252 = vmatprep.subr.mxu0 0.0
        %253 = vmatpush1.msra.mxu0 0.0
        %254 = vmatprep.subr.mxu0 0.0
        %255 = vmatpush1.msra.mxu0 0.0
        %256 = vmatprep.subr.mxu0 0.0
        %257 = vmatpush1.msra.mxu0 0.0
        %258 = vmatprep.subr.mxu0 0.0
        %259 = vmatpush1.msra.mxu0 0.0
        %260 = vmatprep.subr.mxu0 0.0
        %261 = vmatpush1.msra.mxu0 0.0
        %262 = vmatprep.subr.mxu0 0.0
        %263 = vmatpush1.msra.mxu0 0.0
        %264 = vmatprep.subr.mxu0 0.0
        %265 = vmatpush1.msra.mxu0 0.0
        %266 = vmatprep.subr.mxu0 0.0
        %267 = vmatpush1.msra.mxu0 0.0
        %268 = vmatprep.subr.mxu0 0.0
        %269 = vmatpush1.msra.mxu0 0.0
        %270 = vmatprep.subr.mxu0 0.0
        %271 = vmatpush1.msra.mxu0 0.0
        %272 = vmatprep.subr.mxu0 0.0
        %273 = vmatpush1.msra.mxu0 0.0
        %274 = vmatprep.subr.mxu0 0.0
        %275 = vmatpush1.msra.mxu0 0.0
        %276 = vmatprep.subr.mxu0 0.0
        %277 = vmatpush1.msra.mxu0 0.0
        %278 = vmatprep.subr.mxu0 0.0
        %279 = vmatpush1.msra.mxu0 0.0
        %280 = vmatprep.subr.mxu0 0.0
        %281 = vmatpush1.msra.mxu0 0.0
        %282 = vmatprep.subr.mxu0 0.0
        %283 = vmatpush1.msra.mxu0 0.0
        %284 = vmatprep.subr.mxu0 0.0
        %285 = vmatpush1.msra.mxu0 0.0
        %286 = vmatprep.subr.mxu0 0.0
        %287 = vmatpush1.msra.mxu0 0.0
        %288 = vmatprep.subr.mxu0 0.0
        %289 = vmatpush1.msra.mxu0 0.0
        %290 = vmatprep.subr.mxu0 0.0
        %291 = vmatpush1.msra.mxu0 0.0
        %292 = vmatprep.mubr.f32.mxu0 0.0
        %293 = vmatmul.mubr.f32.gmra.mrb[0].mxu0 %v217
        %v294 = vpop.f32.mrb[0].mxu0
        %v295 = vadd.f32 %v213, %v294
        %v296 = vpop.f32.mrb[0].mxu0
        %297 = vmatprep.mubr.f32.mxu0 0.0
        %298 = vmatmul.mubr.f32.gmra.mrb[0].mxu0 %v220
        %v299 = vpop.f32.mrb[0].mxu0
        %v300 = vadd.f32 %v213, %v299
        %v301 = vpop.f32.mrb[0].mxu0
        %302 = vmatprep.mubr.f32.mxu0 0.0
        %303 = vmatmul.mubr.f32.gmra.mrb[0].mxu0 %v223
        %v304 = vpop.f32.mrb[0].mxu0
        %v305 = vadd.f32 %v213, %v304
        %v306 = vpop.f32.mrb[0].mxu0
        %307 = vmatprep.mubr.f32.mxu0 0.0
        %308 = vmatmul.mubr.f32.gmra.mrb[0].mxu0 %v226
        %v309 = vpop.f32.mrb[0].mxu0
        %v310 = vadd.f32 %v213, %v309
        %v311 = vpop.f32.mrb[0].mxu0
        %312 = vdwg.mxu0
        %vm313 = vcmask 785408
        %314 = vst.msk [vmem:[%s188] sm:$0xff] %vm313, %v295
        %315 = vst.msk [vmem:[%s188 + $0x8] sm:$0xff] %vm313, %v300
        %316 = vst.msk [vmem:[%s188 + $0x10] sm:$0xff] %vm313, %v305
        %317 = vst.msk [vmem:[%s188 + $0x18] sm:$0xff] %vm313, %v310
        %s318 = sand.u32 %s109, 1
        %s319 = scalar_lea.sflag [#allocation3], %s318
        %s320 = sand.u32 %s109, 1
        %s321 = smul.addr %s320, 32
        %s322 = scalar_lea.vmem [#allocation2], %s321
        // Predicated region
        $region33: #{tpu_custom_call.1} parent=31 // pred_check
          %p323 = pneg %p119
        $region34: #{tpu_custom_call.1} parent=31 // pred_check_branch
          %325 = sbr.rel (%p323) target = $region36
        $region35: #{tpu_custom_call.1} parent=31 // pred_region
          %s326 = smul.u32 4, %s22
          %s328 = ssub.s32 512, 512
          %329 = vsyncadd %s319, %s328
          %s330 = smul.addr %s21, 8
          %s331 = sadd.s32 %s326, %s330
          %s332 = smul.addr %s331, 128
          %s333 = scalar_lea.hbm %s3, %s332
          %s334 = sshll.u32 %s322, 4
          %s335 = int_to_ptr.vmem [resolvable:$true] %s334
          %340 = dma.vmem_to_hbm [thread:$0]  %s335, 512, %s333, %s319, 128, 128, 8
        $region36: #{tpu_custom_call.1} parent=31 // pred_fallthru
          _
      $region32: #{tpu_custom_call.1} parent=5 // pred_fallthru
        _
      %p341 = scmp.le.s32.totalorder 2, %s12
      // Predicated region
      $region37: #{tpu_custom_call.1} parent=5 // pred_check
        %p342 = pneg %p341
      $region38: #{tpu_custom_call.1} parent=5 // pred_check_branch
        %344 = sbr.rel (%p342) target = $region40
      $region39: #{tpu_custom_call.1} parent=5 // pred_region
        %s345 = ssub.s32 %s12, 2
        // Predicated region
        $region41: #{tpu_custom_call.1} parent=39 // pred_check
          %p346 = pneg %p125
        $region42: #{tpu_custom_call.1} parent=39 // pred_check_branch
          %348 = sbr.rel (%p346) target = $region44
        $region43: #{tpu_custom_call.1} parent=39 // pred_region
          %s349 = sand.u32 %s110, 1
          %s350 = scalar_lea.sflag [#allocation3], %s349
          %s351 = sand.u32 %s110, 1
          %s352 = smul.addr %s351, 32
          %s353 = scalar_lea.vmem [#allocation2], %s352
          %354 = dma.done %s350, 512
        $region44: #{tpu_custom_call.1} parent=39 // pred_fallthru
          _
      $region40: #{tpu_custom_call.1} parent=5 // pred_fallthru
        _
    $region6: #{tpu_custom_call.1} parent=1 // loop_footer
      %s16 = sadd.s32 1, %s12
    $region7: #{tpu_custom_call.1} parent=1 // loop_footer_branch
      %11 = sbr.rel target = $region3
    $region8: #{tpu_custom_call.1} parent=1 // loop_exit
      _
    %355 = vsyncpa [#allocation3], 1
    %s356 = scalar_lea.sflag [#allocation3], 1
    %357 = vsyncpa %s356, 1

</llo_original>
